<compile_context>
chip_gen: v5e
topology: v5e:2x2
jax: 0.10.0
libtpu: 0.0.40
codegen_flags: <defaults>
</compile_context>

<pallas_src>
from functools import partial

import jax
import jax.numpy as jnp
from jax.experimental import pallas as pl
from jax.experimental.pallas import tpu as pltpu


def tictactoe_kernel(x_ref, w1p_ref, w2_ref, b2_ref, o_ref):
    # x_ref:   (10, TB) bf16  rows 0:9 = board features, row 9 = ones (bias fold)
    # w1p_ref: (128, 10) bf16 cols 0:9 = fc1 weight (out,in), col 9 = fc1 bias
    # w2_ref:  (9, 128)  bf16 fc2 weight (out, in)
    # b2_ref:  (9, 1)    f32  fc2 bias
    # o_ref:   (9, TB)   f32
    h = jnp.dot(w1p_ref[...], x_ref[...],
                preferred_element_type=jnp.float32)          # (128, TB) fc1 + b1
    h = jnp.maximum(h, 0.0)                                  # relu
    out = jnp.dot(w2_ref[...], h.astype(jnp.bfloat16),
                  preferred_element_type=jnp.float32)        # (9, TB)
    o_ref[...] = out + b2_ref[...]                           # + b2 (broadcast)


def _default_tile(B):
    """Lane-dense tile: as big as sensible (<=1024) but >= 2 grid steps when
    the batch allows, so the parallel axis can use both v7x TensorCores."""
    half = -(-B // 2)                   # ceil(B / 2)
    half = -(-half // 128) * 128        # round up to whole 128-lane vregs
    return max(128, min(1024, half))


def tictactoe_net_featmajor(x_aug, w1p, w2b, b2c, *, tb=None):
    """Feature-major fast path (no wrapper-side layout passes).

    x_aug: (10, B) bf16 feature-major boards with a trailing ones row.
    w1p:   (128, 10) bf16 = [fc1.weight | fc1.bias]
    w2b:   (9, 128)  bf16 = fc2.weight
    b2c:   (9, 1)    f32  = fc2.bias
    Returns (9, B) f32 logits (feature-major).
    """
    B = x_aug.shape[1]
    if tb is None:
        tb = _default_tile(B)
    grid = (pl.cdiv(B, tb),)

    cost = pl.CostEstimate(
        flops=2 * B * (10 * 128 + 128 * 9),
        transcendentals=0,
        bytes_accessed=(x_aug.size * 2 + 9 * B * 4
                        + w1p.size * 2 + w2b.size * 2 + b2c.size * 4),
    )

    return pl.pallas_call(
        tictactoe_kernel,
        out_shape=jax.ShapeDtypeStruct((9, B), jnp.float32),
        grid=grid,
        in_specs=[
            # Batch tile i of the boards; weights use constant index_maps so
            # they are DMA'd once and stay VMEM-resident across the grid.
            pl.BlockSpec((10, tb), lambda i: (0, i)),
            pl.BlockSpec((128, 10), lambda i: (0, 0)),
            pl.BlockSpec((9, 128), lambda i: (0, 0)),
            pl.BlockSpec((9, 1), lambda i: (0, 0)),
        ],
        out_specs=pl.BlockSpec((9, tb), lambda i: (0, i)),
        compiler_params=pltpu.CompilerParams(
            dimension_semantics=("parallel",),  # shard batch across 2 TCs on v7x
        ),
        cost_estimate=cost,
    )(x_aug, w1p, w2b, b2c)


@partial(jax.jit, static_argnames=("tb",))
def tictactoe_net(x, w1, b1, w2, b2, tb=None):
    """PyTorch-compatible forward pass of TicTacToeNet.

    x:  (B, 9)   float32 board states.
    w1: (128, 9) fc1 weight in PyTorch (out, in) layout;  b1: (128,)
    w2: (9, 128) fc2 weight in PyTorch (out, in) layout;  b2: (9,)
    Returns (B, 9) float32 logits.
    """
    B = x.shape[0]

    # Single layout pass in: feature-major + ones row (fc1 bias fold) + bf16.
    ones = jnp.ones((1, B), jnp.float32)
    x_aug = jnp.concatenate([x.T, ones], axis=0).astype(jnp.bfloat16)   # (10, B)

    # Pack fc1 bias as an extra weight column; bf16 MXU operands.
    w1p = jnp.concatenate([w1, b1[:, None]], axis=1).astype(jnp.bfloat16)  # (128, 10)
    w2b = w2.astype(jnp.bfloat16)                                          # (9, 128)
    b2c = b2[:, None]                                                      # (9, 1) f32

    out_fm = tictactoe_net_featmajor(x_aug, w1p, w2b, b2c, tb=tb)         # (9, B)
    return out_fm.T                                                        # (B, 9)


def init_params(key):
    """Deterministic init mirroring nn.Linear (PyTorch (out, in) layout)."""
    k1, k2, k3, k4 = jax.random.split(key, 4)
    lim1 = 1.0 / jnp.sqrt(9.0)
    w1 = jax.random.uniform(k1, (128, 9), jnp.float32, -lim1, lim1)
    b1 = jax.random.uniform(k2, (128,), jnp.float32, -lim1, lim1)
    lim2 = 1.0 / jnp.sqrt(128.0)
    w2 = jax.random.uniform(k3, (9, 128), jnp.float32, -lim2, lim2)
    b2 = jax.random.uniform(k4, (9,), jnp.float32, -lim2, lim2)
    return w1, b1, w2, b2


if __name__ == "__main__":
    key = jax.random.PRNGKey(0)
    k_params, k_x1, k_x2 = jax.random.split(key, 3)
    w1, b1, w2, b2 = init_params(k_params)

    # Reference mirroring the kernel's numerics: bf16 operands, f32 accumulation.
    w1b = w1.astype(jnp.bfloat16)
    b1b = b1.astype(jnp.bfloat16).astype(jnp.float32)
    w2bb = w2.astype(jnp.bfloat16)

    def ref_forward(xx):
        h = jnp.dot(xx.astype(jnp.bfloat16), w1b.T,
                    preferred_element_type=jnp.float32) + b1b
        h = jnp.maximum(h, 0.0)
        return jnp.dot(h.astype(jnp.bfloat16), w2bb.T,
                       preferred_element_type=jnp.float32) + b2

    # Batched case: default adaptive tile -> 2 grid steps (tb=128 for B=256).
    B = 256
    x = jax.random.randint(k_x1, (B, 9), -1, 2).astype(jnp.float32)
    out = jax.block_until_ready(tictactoe_net(x, w1, b1, w2, b2))
    assert out.shape == (B, 9)
    assert jnp.allclose(out, ref_forward(x), atol=1e-3, rtol=1e-3)

    # Small, non-multiple-of-tile batch exercises the ragged (unpadded) path.
    Bs = 5
    xs = jax.random.randint(k_x2, (Bs, 9), -1, 2).astype(jnp.float32)
    outs = jax.block_until_ready(tictactoe_net(xs, w1, b1, w2, b2, tb=128))
    assert outs.shape == (Bs, 9)
    assert jnp.allclose(outs, ref_forward(xs), atol=1e-3, rtol=1e-3)

    print("KERNEL_OK")
</pallas_src>

<mosaic_0001>
module attributes {stable_mosaic.version = 11 : i64} {
  func.func @tictactoe_kernel(%arg0: i32, %arg1: memref<10x128xbf16, #tpu.memory_space<vmem>>, %arg2: memref<128x10xbf16, #tpu.memory_space<vmem>>, %arg3: memref<9x128xbf16, #tpu.memory_space<vmem>>, %arg4: memref<9x1xf32, #tpu.memory_space<vmem>>, %arg5: memref<9x128xf32, #tpu.memory_space<vmem>>) attributes {dimension_semantics = [#tpu.dimension_semantics<parallel>], iteration_bounds = array<i64: 2>, scalar_prefetch = 0 : i64, scratch_operands = 0 : i64, tpu.core_type = #tpu.core_type<tc>, window_params = [{transform_indices = @transform_0, window_bounds = array<i64: 10, 128>}, {pipeline_mode = #tpu.pipeline_mode<synchronous>, transform_indices = @transform_1, window_bounds = array<i64: 128, 10>}, {pipeline_mode = #tpu.pipeline_mode<synchronous>, transform_indices = @transform_2, window_bounds = array<i64: 9, 128>}, {pipeline_mode = #tpu.pipeline_mode<synchronous>, transform_indices = @transform_3, window_bounds = array<i64: 9, 1>}, {transform_indices = @transform_4, window_bounds = array<i64: 9, 128>}]} {
    %c0 = arith.constant 0 : index
    %c0_0 = arith.constant 0 : index
    %0 = vector.load %arg2[%c0, %c0_0] : memref<128x10xbf16, #tpu.memory_space<vmem>>, vector<128x10xbf16>
    %c0_1 = arith.constant 0 : index
    %c0_2 = arith.constant 0 : index
    %1 = vector.load %arg1[%c0_1, %c0_2] : memref<10x128xbf16, #tpu.memory_space<vmem>>, vector<10x128xbf16>
    %cst = arith.constant dense<0.000000e+00> : vector<128x128xf32>
    %2 = tpu.matmul %0, %1, %cst {dimension_numbers = #tpu.dot_dimension_numbers<[1], [0], [0], [1], [0, 0, 1, 1], [], []>} : vector<128x10xbf16>, vector<10x128xbf16>, vector<128x128xf32> -> vector<128x128xf32>
    %cst_3 = arith.constant 0.000000e+00 : f32
    %3 = vector.broadcast %cst_3 : f32 to vector<128x128xf32>
    %4 = arith.maximumf %2, %3 : vector<128x128xf32>
    %c0_4 = arith.constant 0 : index
    %c0_5 = arith.constant 0 : index
    %5 = vector.load %arg3[%c0_4, %c0_5] : memref<9x128xbf16, #tpu.memory_space<vmem>>, vector<9x128xbf16>
    %6 = arith.truncf %4 : vector<128x128xf32> to vector<128x128xbf16>
    %cst_6 = arith.constant dense<0.000000e+00> : vector<9x128xf32>
    %7 = tpu.matmul %5, %6, %cst_6 {dimension_numbers = #tpu.dot_dimension_numbers<[1], [0], [0], [1], [0, 0, 1, 1], [], []>} : vector<9x128xbf16>, vector<128x128xbf16>, vector<9x128xf32> -> vector<9x128xf32>
    %c0_7 = arith.constant 0 : index
    %c0_8 = arith.constant 0 : index
    %8 = vector.load %arg4[%c0_7, %c0_8] : memref<9x1xf32, #tpu.memory_space<vmem>>, vector<9x1xf32>
    %9 = vector.broadcast %8 : vector<9x1xf32> to vector<9x128xf32>
    %10 = arith.addf %7, %9 : vector<9x128xf32>
    %c0_9 = arith.constant 0 : index
    %c0_10 = arith.constant 0 : index
    %11 = vector.load %arg5[%c0_9, %c0_10] : memref<9x128xf32, #tpu.memory_space<vmem>>, vector<9x128xf32>
    tpu.vector_store %arg5[%c0_9, %c0_10], %10 {strides = array<i32>} : memref<9x128xf32, #tpu.memory_space<vmem>>, vector<9x128xf32>,
    return
  }
  func.func @transform_0(%arg0: i32) -> (i32, i32) {
    %c0_i32 = arith.constant 0 : i32
    %c0_i32_0 = arith.constant 0 : i32
    return %c0_i32, %arg0 : i32, i32
  }
  func.func @transform_1(%arg0: i32) -> (i32, i32) {
    %c0_i32 = arith.constant 0 : i32
    %c0_i32_0 = arith.constant 0 : i32
    %c0_i32_1 = arith.constant 0 : i32
    return %c0_i32, %c0_i32_0 : i32, i32
  }
  func.func @transform_2(%arg0: i32) -> (i32, i32) {
    %c0_i32 = arith.constant 0 : i32
    %c0_i32_0 = arith.constant 0 : i32
    %c0_i32_1 = arith.constant 0 : i32
    return %c0_i32, %c0_i32_0 : i32, i32
  }
  func.func @transform_3(%arg0: i32) -> (i32, i32) {
    %c0_i32 = arith.constant 0 : i32
    %c0_i32_0 = arith.constant 0 : i32
    %c0_i32_1 = arith.constant 0 : i32
    return %c0_i32, %c0_i32_0 : i32, i32
  }
  func.func @transform_4(%arg0: i32) -> (i32, i32) {
    %c0_i32 = arith.constant 0 : i32
    %c0_i32_0 = arith.constant 0 : i32
    return %c0_i32, %arg0 : i32, i32
  }
}

</mosaic_0001>

<llo_original>
// kernel: tictactoe_net.1
$region0: #{tictactoe_net.1}
  #allocation0 [shape = 'u32[]', space=smem, size = 0x4, offset = 0x4, fixed_abs, tag = 'smem constant byte address 0x4 - core index']
  #allocation1 [shape = 'u32[72,128]{1,0:T(1,128)}', space=vmem, size = 0x9000, scoped, tag = 'internal scratch']
  %s0 = inlined_call_operand.vmem [shape: bf16[10,256], index: 0, kind: input, shape index: {}]
  %s1 = inlined_call_operand.vmem [shape: bf16[128,10], index: 1, kind: input, shape index: {}]
  %s2 = inlined_call_operand.vmem [shape: bf16[9,128], index: 2, kind: input, shape index: {}]
  %s3 = inlined_call_operand.vmem [shape: f32[9,1], index: 3, kind: input, shape index: {}]
  %s4 = inlined_call_operand.hbm [shape: f32[9,256], index: 4, kind: output, shape index: {}]
  %s5 = sld [smem:[#allocation0]]
  $region90: #{tictactoe_net.1} parent=0
    _
  %s7 = ssub.s32 1, %s5
  %s8 = scalar_select 0, %s7, %s5
  $region1: #{tictactoe_net.1} parent=0
    #allocation2 [shape = 'u8[8192]{0}', space=vmem, size = 0x2000, scoped, tag = 'input window, operand 0']
    #allocation3 [shape = 'u8[16384]{0}', space=vmem, size = 0x4000, scoped, tag = 'output window, operand 0']
    #allocation4 [shape = 's32[2]{0}', space=sflag, size = 0x8, scoped, tag = 'scoped memory for tictactoe_net.1']
    %9 = vsyncpa [#allocation4], 0
    %s10 = scalar_lea.sflag [#allocation4], 1
    %11 = vsyncpa %s10, 0
    loop: start=0, step=1, limit=4
    $region2: #{tictactoe_net.1} parent=1 // loop_pre_header
      _
    $region3: #{tictactoe_net.1} parent=1 // loop_header
      %s13 = sphi 0, %s17
      %p14 = scmp.ge.s32.totalorder %s13, 4
      %s23 = sphi 0, %s25
      %s26 = sphi 0, %s23
      %s27 = sphi 0, %s26
      %s43 = sphi 0, %s27
      %s47 = sphi 0, %s47
      %s49 = sphi 0, %s47
      %s50 = sphi 0, %s49
      %s64 = sphi 0, %s50
      %s68 = sphi 0, %s68
      %s70 = sphi 0, %s68
      %s71 = sphi 0, %s70
      %s85 = sphi 0, %s71
      %s89 = sphi 0, %s89
      %s91 = sphi 0, %s89
      %s92 = sphi 0, %s91
      %s106 = sphi 0, %s92
      %s112 = sphi 0, %s114
      %s115 = sphi 0, %s112
      %s116 = sphi 0, %s115
      %s132 = sphi 0, %s116
    $region4: #{tictactoe_net.1} parent=1 // loop_header_branch
      %16 = sbr.rel (%p14) target = $region8
    $region5: #{tictactoe_net.1} parent=1 // loop_body
      %s18 = ssub.s32 %s13, 1
      %s19 = ssub.s32 %s13, 2
      %s20 = sadd.s32 %s13, 1
      %s21 = ssub.s32 %s13, %s20
      %p22 = scmp.eq.s32.totalorder %s21, 0
      %s24 = sadd.s32 %s23, 1
      %s25 = scalar_select %p22, %s23, %s24
      %p28 = pneg %p22
      %p29 = scmp.eq.s32.totalorder %s13, 1
      %p30 = por %p28, %p29
      %p31 = scmp.ne.s32.totalorder %s23, %s26
      %p32 = scmp.eq.s32.totalorder %s13, 0
      %p33 = por %p31, %p32
      %p34 = scmp.ne.s32.totalorder %s23, %s26
      %p35 = scmp.eq.s32.totalorder %s18, 1
      %p36 = por %p34, %p35
      %p37 = scmp.ne.s32.totalorder %s26, %s27
      %p38 = scmp.eq.s32.totalorder %s18, 0
      %p39 = por %p37, %p38
      %p40 = scmp.ne.s32.totalorder %s26, %s27
      %p41 = scmp.eq.s32.totalorder %s19, 1
      %p42 = por %p40, %p41
      %p44 = scmp.ne.s32.totalorder %s27, %s43
      %p45 = scmp.eq.s32.totalorder %s19, 0
      %p46 = por %p44, %p45
      %s48 = sadd.s32 %s47, 1
      %p51 = scmp.eq.s32.totalorder %s13, 1
      %p52 = scmp.ne.s32.totalorder %s47, %s49
      %p53 = scmp.eq.s32.totalorder %s13, 0
      %p54 = por %p52, %p53
      %p55 = scmp.ne.s32.totalorder %s47, %s49
      %p56 = scmp.eq.s32.totalorder %s18, 1
      %p57 = por %p55, %p56
      %p58 = scmp.ne.s32.totalorder %s49, %s50
      %p59 = scmp.eq.s32.totalorder %s18, 0
      %p60 = por %p58, %p59
      %p61 = scmp.ne.s32.totalorder %s49, %s50
      %p62 = scmp.eq.s32.totalorder %s19, 1
      %p63 = por %p61, %p62
      %p65 = scmp.ne.s32.totalorder %s50, %s64
      %p66 = scmp.eq.s32.totalorder %s19, 0
      %p67 = por %p65, %p66
      %s69 = sadd.s32 %s68, 1
      %p72 = scmp.eq.s32.totalorder %s13, 1
      %p73 = scmp.ne.s32.totalorder %s68, %s70
      %p74 = scmp.eq.s32.totalorder %s13, 0
      %p75 = por %p73, %p74
      %p76 = scmp.ne.s32.totalorder %s68, %s70
      %p77 = scmp.eq.s32.totalorder %s18, 1
      %p78 = por %p76, %p77
      %p79 = scmp.ne.s32.totalorder %s70, %s71
      %p80 = scmp.eq.s32.totalorder %s18, 0
      %p81 = por %p79, %p80
      %p82 = scmp.ne.s32.totalorder %s70, %s71
      %p83 = scmp.eq.s32.totalorder %s19, 1
      %p84 = por %p82, %p83
      %p86 = scmp.ne.s32.totalorder %s71, %s85
      %p87 = scmp.eq.s32.totalorder %s19, 0
      %p88 = por %p86, %p87
      %s90 = sadd.s32 %s89, 1
      %p93 = scmp.eq.s32.totalorder %s13, 1
      %p94 = scmp.ne.s32.totalorder %s89, %s91
      %p95 = scmp.eq.s32.totalorder %s13, 0
      %p96 = por %p94, %p95
      %p97 = scmp.ne.s32.totalorder %s89, %s91
      %p98 = scmp.eq.s32.totalorder %s18, 1
      %p99 = por %p97, %p98
      %p100 = scmp.ne.s32.totalorder %s91, %s92
      %p101 = scmp.eq.s32.totalorder %s18, 0
      %p102 = por %p100, %p101
      %p103 = scmp.ne.s32.totalorder %s91, %s92
      %p104 = scmp.eq.s32.totalorder %s19, 1
      %p105 = por %p103, %p104
      %p107 = scmp.ne.s32.totalorder %s92, %s106
      %p108 = scmp.eq.s32.totalorder %s19, 0
      %p109 = por %p107, %p108
      %s110 = ssub.s32 %s13, %s20
      %p111 = scmp.eq.s32.totalorder %s110, 0
      %s113 = sadd.s32 %s112, 1
      %s114 = scalar_select %p111, %s112, %s113
      %p117 = pneg %p111
      %p118 = scmp.eq.s32.totalorder %s13, 1
      %p119 = por %p117, %p118
      %p120 = scmp.ne.s32.totalorder %s112, %s115
      %p121 = scmp.eq.s32.totalorder %s13, 0
      %p122 = por %p120, %p121
      %p123 = scmp.ne.s32.totalorder %s112, %s115
      %p124 = scmp.eq.s32.totalorder %s18, 1
      %p125 = por %p123, %p124
      %p126 = scmp.ne.s32.totalorder %s115, %s116
      %p127 = scmp.eq.s32.totalorder %s18, 0
      %p128 = por %p126, %p127
      %p129 = scmp.ne.s32.totalorder %s115, %s116
      %p130 = scmp.eq.s32.totalorder %s19, 1
      %p131 = por %p129, %p130
      %p133 = scmp.ne.s32.totalorder %s116, %s132
      %p134 = scmp.eq.s32.totalorder %s19, 0
      %p135 = por %p133, %p134
      %p136 = scmp.le.s32.totalorder 1, %s13
      %p137 = scmp.lt.s32.totalorder %s13, 3
      %p138 = pnand %p136, %p137
      %p139 = pneg %p138
      // Predicated region
      $region9: #{tictactoe_net.1} parent=5 // pred_check
        _
      $region10: #{tictactoe_net.1} parent=5 // pred_check_branch
        %141 = sbr.rel (%p138) target = $region12
      $region11: #{tictactoe_net.1} parent=5 // pred_region
        %s142 = ssub.s32 %s13, 1
        // Predicated region
        $region13: #{tictactoe_net.1} parent=11 // pred_check
          %p143 = pneg %p60
        $region14: #{tictactoe_net.1} parent=11 // pred_check_branch
          %145 = sbr.rel (%p143) target = $region16
        $region15: #{tictactoe_net.1} parent=11 // pred_region
          _
        $region16: #{tictactoe_net.1} parent=11 // pred_fallthru
          _
        // Predicated region
        $region17: #{tictactoe_net.1} parent=11 // pred_check
          %p146 = pneg %p81
        $region18: #{tictactoe_net.1} parent=11 // pred_check_branch
          %148 = sbr.rel (%p146) target = $region20
        $region19: #{tictactoe_net.1} parent=11 // pred_region
          _
        $region20: #{tictactoe_net.1} parent=11 // pred_fallthru
          _
        // Predicated region
        $region21: #{tictactoe_net.1} parent=11 // pred_check
          %p149 = pneg %p102
        $region22: #{tictactoe_net.1} parent=11 // pred_check_branch
          %151 = sbr.rel (%p149) target = $region24
        $region23: #{tictactoe_net.1} parent=11 // pred_region
          _
        $region24: #{tictactoe_net.1} parent=11 // pred_fallthru
          _
      $region12: #{tictactoe_net.1} parent=5 // pred_fallthru
        _
      %p152 = scmp.lt.s32.totalorder %s13, 2
      // Predicated region
      $region25: #{tictactoe_net.1} parent=5 // pred_check
        %p153 = pneg %p152
      $region26: #{tictactoe_net.1} parent=5 // pred_check_branch
        %155 = sbr.rel (%p153) target = $region28
      $region27: #{tictactoe_net.1} parent=5 // pred_region
        // Predicated region
        $region29: #{tictactoe_net.1} parent=27 // pred_check
          %p156 = pneg %p33
        $region30: #{tictactoe_net.1} parent=27 // pred_check_branch
          %158 = sbr.rel (%p156) target = $region32
        $region31: #{tictactoe_net.1} parent=27 // pred_region
          %s159 = sand.u32 %s23, 1
          %s160 = sand.u32 %s23, 1
          %s161 = smul.addr %s160, 8
          %s162 = scalar_lea.vmem [#allocation2], %s161
          %s163 = smul.addr %s13, 4
          %s164 = scalar_lea.vmem %s0, %s163
          // Predicated region
          $region33: #{tictactoe_net.1} parent=31 // pred_check
            _
          $region34: #{tictactoe_net.1} parent=31 // pred_check_branch
            %166 = sbr.rel (0) target = $region36
          $region35: #{tictactoe_net.1} parent=31 // pred_region
            // Predicated region
            $region37: #{tictactoe_net.1} parent=35 // pred_check
              _
            $region38: #{tictactoe_net.1} parent=35 // pred_check_branch
              %168 = sbr.rel target = $region40
            $region39: #{tictactoe_net.1} parent=35 // pred_region
              // Predicated region
              $region52: #{tictactoe_net.1} parent=39 // pred_check
                _
              $region53: #{tictactoe_net.1} parent=39 // pred_check_branch
                %186 = sbr.rel (0) target = $region55
              $region54: #{tictactoe_net.1} parent=39 // pred_region
                loop: start=0, step=1, limit=1
                $region56: #{tictactoe_net.1} parent=54 // loop_pre_header
                  _
                $region57: #{tictactoe_net.1} parent=54 // loop_header
                  %s188 = sphi 0, %s192
                  %p189 = scmp.ge.s32.totalorder %s188, 1
                  %s193 = sphi %s164, %s164
                  %s194 = sphi %s162, %s162
                $region58: #{tictactoe_net.1} parent=54 // loop_header_branch
                  %191 = sbr.rel (%p189) target = $region62
                $region59: #{tictactoe_net.1} parent=54 // loop_body
                  _
                $region60: #{tictactoe_net.1} parent=54 // loop_footer
                  %s192 = sadd.s32 1, %s188
                $region61: #{tictactoe_net.1} parent=54 // loop_footer_branch
                  %187 = sbr.rel target = $region57
                $region62: #{tictactoe_net.1} parent=54 // loop_exit
                  _
                %s196 = ssub.s32 16, 1
                loop: start=0, step=1, limit=1
                $region63: #{tictactoe_net.1} parent=54 // loop_pre_header
                  _
                $region64: #{tictactoe_net.1} parent=54 // loop_header
                  %s198 = sphi 0, %s202
                  %p199 = scmp.ge.s32.totalorder %s198, 1
                  %s203 = sphi %s164, %s164
                  %s204 = sphi %s162, %s162
                $region65: #{tictactoe_net.1} parent=54 // loop_header_branch
                  %201 = sbr.rel (%p199) target = $region69
                $region66: #{tictactoe_net.1} parent=54 // loop_body
                  %v205 = vld [vmem:[%s203] sm:%s196]
                  %206 = vst [vmem:[%s204] sm:%s196] %v205
                  %v207 = vld [vmem:[%s203 + $0x8] sm:%s196]
                  %208 = vst [vmem:[%s204 + $0x4] sm:%s196] %v207
                $region67: #{tictactoe_net.1} parent=54 // loop_footer
                  %s202 = sadd.s32 1, %s198
                $region68: #{tictactoe_net.1} parent=54 // loop_footer_branch
                  %197 = sbr.rel target = $region64
                $region69: #{tictactoe_net.1} parent=54 // loop_exit
                  _
              $region55: #{tictactoe_net.1} parent=39 // pred_fallthru
                _
            $region40: #{tictactoe_net.1} parent=35 // pred_fallthru
              _
            // Predicated region
            $region41: #{tictactoe_net.1} parent=35 // pred_check
              _
            $region42: #{tictactoe_net.1} parent=35 // pred_check_branch
              %170 = sbr.rel (0) target = $region44
            $region43: #{tictactoe_net.1} parent=35 // pred_region
              %s172 = ssub.s32 16, 1
              loop: start=0, step=1, limit=1
              $region45: #{tictactoe_net.1} parent=43 // loop_pre_header
                _
              $region46: #{tictactoe_net.1} parent=43 // loop_header
                %s174 = sphi 0, %s178
                %p175 = scmp.ge.s32.totalorder %s174, 1
                %s179 = sphi %s164, %s164
                %s180 = sphi %s162, %s162
              $region47: #{tictactoe_net.1} parent=43 // loop_header_branch
                %177 = sbr.rel (%p175) target = $region51
              $region48: #{tictactoe_net.1} parent=43 // loop_body
                %v181 = vld [vmem:[%s179] sm:%s172]
                %182 = vst [vmem:[%s180] sm:%s172] %v181
                %v183 = vld [vmem:[%s179 + $0x8] sm:%s172]
                %184 = vst [vmem:[%s180 + $0x4] sm:%s172] %v183
              $region49: #{tictactoe_net.1} parent=43 // loop_footer
                %s178 = sadd.s32 1, %s174
              $region50: #{tictactoe_net.1} parent=43 // loop_footer_branch
                %173 = sbr.rel target = $region46
              $region51: #{tictactoe_net.1} parent=43 // loop_exit
                _
            $region44: #{tictactoe_net.1} parent=35 // pred_fallthru
              _
          $region36: #{tictactoe_net.1} parent=31 // pred_fallthru
            _
          %209 = vnop
        $region32: #{tictactoe_net.1} parent=27 // pred_fallthru
          _
      $region28: #{tictactoe_net.1} parent=5 // pred_fallthru
        _
      %p210 = scmp.le.s32.totalorder 1, %s13
      %p211 = scmp.lt.s32.totalorder %s13, 3
      %p212 = pnand %p210, %p211
      %p213 = pneg %p212
      // Predicated region
      $region70: #{tictactoe_net.1} parent=5 // pred_check
        _
      $region71: #{tictactoe_net.1} parent=5 // pred_check_branch
        %215 = sbr.rel (%p212) target = $region73
      $region72: #{tictactoe_net.1} parent=5 // pred_region
        %s216 = ssub.s32 %s13, 1
        %s217 = sand.u32 %s26, 1
        %s218 = sand.u32 %s26, 1
        %s219 = smul.addr %s218, 8
        %s220 = scalar_lea.vmem [#allocation2], %s219
        // Predicated region
        $region74: #{tictactoe_net.1} parent=72 // pred_check
          %p221 = pneg %p39
        $region75: #{tictactoe_net.1} parent=72 // pred_check_branch
          %223 = sbr.rel (%p221) target = $region77
        $region76: #{tictactoe_net.1} parent=72 // pred_region
          _
        $region77: #{tictactoe_net.1} parent=72 // pred_fallthru
          _
        %s224 = sand.u32 %s26, 1
        %s225 = sand.u32 %s26, 1
        %s226 = smul.addr %s225, 8
        %s227 = scalar_lea.vmem [#allocation2], %s226
        %p228 = pneg %p39
        %p229 = pneg %p36
        %p230 = pneg %p60
        %p231 = pneg %p57
        %p232 = pneg %p81
        %p233 = pneg %p78
        %p234 = pneg %p102
        %p235 = pneg %p99
        %p236 = pneg %p128
        %p237 = pneg %p125
        %s238 = sand.u32 %s115, 1
        %s239 = scalar_lea.sflag [#allocation4], %s238
        %s240 = sand.u32 %s115, 1
        %s241 = smul.addr %s240, 16
        %s242 = scalar_lea.vmem [#allocation3], %s241
        %v244 = vld [vmem:[%s1] sm:$0xf]
        %v245 = vld [vmem:[%s1 + $0x4] sm:$0xf]
        %v246 = vld [vmem:[%s1 + $0x8] sm:$0xf]
        %v247 = vld [vmem:[%s1 + $0xc] sm:$0xf]
        %v248 = vld [vmem:[%s1 + $0x10] sm:$0xf]
        %v249 = vld [vmem:[%s1 + $0x14] sm:$0xf]
        %v250 = vld [vmem:[%s1 + $0x18] sm:$0xf]
        %v251 = vld [vmem:[%s1 + $0x1c] sm:$0xf]
        %v252 = vld [vmem:[%s1 + $0x20] sm:$0xf]
        %v253 = vld [vmem:[%s1 + $0x24] sm:$0xf]
        %v254 = vld [vmem:[%s1 + $0x28] sm:$0xf]
        %v255 = vld [vmem:[%s1 + $0x2c] sm:$0xf]
        %v256 = vld [vmem:[%s1 + $0x30] sm:$0xf]
        %v257 = vld [vmem:[%s1 + $0x34] sm:$0xf]
        %v258 = vld [vmem:[%s1 + $0x38] sm:$0xf]
        %v259 = vld [vmem:[%s1 + $0x3c] sm:$0xf]
        %v260 = vld [vmem:[%s220] sm:$0xf]
        %v261 = vld [vmem:[%s220 + $0x4] sm:$0x1]
        %v278 = vunpack.c.l.b16 %v244
        %v279 = vunpack.c.l.b16 %v245
        %v280 = vunpack.c.l.b16 %v246
        %v281 = vunpack.c.l.b16 %v247
        %v282 = vunpack.c.l.b16 %v248
        %v283 = vunpack.c.l.b16 %v249
        %v284 = vunpack.c.l.b16 %v250
        %v285 = vunpack.c.l.b16 %v251
        %v286 = vunpack.c.l.b16 %v252
        %v287 = vunpack.c.l.b16 %v253
        %v288 = vunpack.c.l.b16 %v254
        %v289 = vunpack.c.l.b16 %v255
        %v290 = vunpack.c.l.b16 %v256
        %v291 = vunpack.c.l.b16 %v257
        %v292 = vunpack.c.l.b16 %v258
        %v293 = vunpack.c.l.b16 %v259
        %v294 = vpack.c.b16 %v279, %v278
        %v295 = vpack.c.b16 %v281, %v280
        %v296 = vpack.c.b16 %v283, %v282
        %v297 = vpack.c.b16 %v285, %v284
        %v298 = vpack.c.b16 %v287, %v286
        %v299 = vpack.c.b16 %v289, %v288
        %v300 = vpack.c.b16 %v291, %v290
        %v301 = vpack.c.b16 %v293, %v292
        %v304 = vunpack.c.l.b16 %v260
        %v305 = vunpack.c.l.b16 %v261
        %v306 = vpack.c.b16 %v305, %v304
        %vm307 = vcmask 80896
        %v309 = vsel %vm307, %v294, 0
        %v312 = vsel %vm307, %v295, 0
        %v315 = vsel %vm307, %v296, 0
        %v318 = vsel %vm307, %v297, 0
        %v321 = vsel %vm307, %v298, 0
        %v324 = vsel %vm307, %v299, 0
        %v327 = vsel %vm307, %v300, 0
        %v330 = vsel %vm307, %v301, 0
        %vm332 = vcmask 1044480
        %v334 = vsel %vm332, %v306, 0
        %336 = vmatpush.bf16.msra.mxu0 0
        %337 = vmatpush.bf16.msra.mxu0 0
        %338 = vmatpush.bf16.msra.mxu0 0
        %339 = vmatpush.bf16.msra.mxu0 0
        %340 = vmatpush.bf16.msra.mxu0 0
        %341 = vmatpush.bf16.msra.mxu0 0
        %342 = vmatpush.bf16.msra.mxu0 0
        %343 = vmatpush.bf16.msra.mxu0 %v334
        %344 = vmatmul.bf16.gmra.mxu0 %v309
        %v345 = vpop.f32.mrf.mxu0
        %v346 = vadd.f32 0.0, %v345
        %v347 = vpop.f32.mrf.mxu0
        %v348 = vadd.f32 0.0, %v347
        %349 = vmatmul.bf16.gmra.mxu0 %v312
        %v350 = vpop.f32.mrf.mxu0
        %v351 = vadd.f32 0.0, %v350
        %v352 = vpop.f32.mrf.mxu0
        %v353 = vadd.f32 0.0, %v352
        %354 = vmatmul.bf16.gmra.mxu0 %v315
        %v355 = vpop.f32.mrf.mxu0
        %v356 = vadd.f32 0.0, %v355
        %v357 = vpop.f32.mrf.mxu0
        %v358 = vadd.f32 0.0, %v357
        %359 = vmatmul.bf16.gmra.mxu0 %v318
        %v360 = vpop.f32.mrf.mxu0
        %v361 = vadd.f32 0.0, %v360
        %v362 = vpop.f32.mrf.mxu0
        %v363 = vadd.f32 0.0, %v362
        %364 = vmatmul.bf16.gmra.mxu0 %v321
        %v365 = vpop.f32.mrf.mxu0
        %v366 = vadd.f32 0.0, %v365
        %v367 = vpop.f32.mrf.mxu0
        %v368 = vadd.f32 0.0, %v367
        %369 = vmatmul.bf16.gmra.mxu0 %v324
        %v370 = vpop.f32.mrf.mxu0
        %v371 = vadd.f32 0.0, %v370
        %v372 = vpop.f32.mrf.mxu0
        %v373 = vadd.f32 0.0, %v372
        %374 = vmatmul.bf16.gmra.mxu0 %v327
        %v375 = vpop.f32.mrf.mxu0
        %v376 = vadd.f32 0.0, %v375
        %v377 = vpop.f32.mrf.mxu0
        %v378 = vadd.f32 0.0, %v377
        %379 = vmatmul.bf16.gmra.mxu0 %v330
        %v380 = vpop.f32.mrf.mxu0
        %v381 = vadd.f32 0.0, %v380
        %v382 = vpop.f32.mrf.mxu0
        %v383 = vadd.f32 0.0, %v382
        %384 = vdwg.mxu0
        %v385 = vmax.f32 %v346, 0.0
        %v386 = vmax.f32 %v348, 0.0
        %v387 = vmax.f32 %v351, 0.0
        %v388 = vmax.f32 %v353, 0.0
        %v389 = vmax.f32 %v356, 0.0
        %v390 = vmax.f32 %v358, 0.0
        %v391 = vmax.f32 %v361, 0.0
        %v392 = vmax.f32 %v363, 0.0
        %v393 = vmax.f32 %v366, 0.0
        %v394 = vmax.f32 %v368, 0.0
        %v395 = vmax.f32 %v371, 0.0
        %v396 = vmax.f32 %v373, 0.0
        %v397 = vmax.f32 %v376, 0.0
        %v398 = vmax.f32 %v378, 0.0
        %v399 = vmax.f32 %v381, 0.0
        %v400 = vmax.f32 %v383, 0.0
        %v401 = vld [vmem:[%s2] sm:$0xf]
        %v402 = vld [vmem:[%s2 + $0x4] sm:$0x1]
        %v403 = vpack.c.bf16 %v386, %v385
        %v404 = vpack.c.bf16 %v388, %v387
        %v405 = vpack.c.bf16 %v390, %v389
        %v406 = vpack.c.bf16 %v392, %v391
        %v407 = vpack.c.bf16 %v394, %v393
        %v408 = vpack.c.bf16 %v396, %v395
        %v409 = vpack.c.bf16 %v398, %v397
        %v410 = vpack.c.bf16 %v400, %v399
        %v411 = vld [vmem:[%s3] sm:$0xff]
        %v412 = vld [vmem:[%s3 + $0x8] sm:$0x1]
        %414 = vset.pattern.permute.xlu0 0
        %415 = vperm.xlu0 %414, %v411
        %v416 = vpop.permute.xlu0 %415
        %419 = vset.pattern.permute.xlu0 0
        %420 = vperm.xlu0 %419, %v412
        %v421 = vpop.permute.xlu0 %420
        %v425 = vunpack.c.l.b16 %v401
        %v426 = vunpack.c.l.b16 %v402
        %v427 = vpack.c.b16 %v426, %v425
        %429 = vmatpush.bf16.msra.mxu0 %v410
        %430 = vmatpush.bf16.msra.mxu0 %v409
        %431 = vmatpush.bf16.msra.mxu0 %v408
        %432 = vmatpush.bf16.msra.mxu0 %v407
        %433 = vmatpush.bf16.msra.mxu0 %v406
        %434 = vmatpush.bf16.msra.mxu0 %v405
        %435 = vmatpush.bf16.msra.mxu0 %v404
        %436 = vmatpush.bf16.msra.mxu0 %v403
        %437 = vmatmul.bf16.gmra.mxu0 %v427
        %v438 = vpop.f32.mrf.mxu0
        %v439 = vadd.f32 %v416, %v438
        %v440 = vpop.f32.mrf.mxu0
        %v441 = vadd.f32 %v421, %v440
        %442 = vdwg.mxu0
        %443 = vst [vmem:[%s242] sm:$0xff] %v439
        %444 = vst [vmem:[%s242 + $0x8] sm:$0x1] %v441
        %s445 = sand.u32 %s115, 1
        %s446 = scalar_lea.sflag [#allocation4], %s445
        %s447 = sand.u32 %s115, 1
        %s448 = smul.addr %s447, 16
        %s449 = scalar_lea.vmem [#allocation3], %s448
        // Predicated region
        $region78: #{tictactoe_net.1} parent=72 // pred_check
          %p450 = pneg %p125
        $region79: #{tictactoe_net.1} parent=72 // pred_check_branch
          %452 = sbr.rel (%p450) target = $region81
        $region80: #{tictactoe_net.1} parent=72 // pred_region
          %454 = vsyncadd %s446, 0
          %s455 = smul.addr %s18, 8
          %s456 = scalar_lea.hbm %s4, %s455
          %s457 = sshll.u32 %s449, 4
          %s458 = int_to_ptr.vmem [resolvable:$true] %s457
          %s459 = sshll.u32 %s456, 4
          %s460 = int_to_ptr.hbm [resolvable:$true] %s459
          %465 = dma.vmem_to_hbm [thread:$0]  %s458, 256, %s460, %s446, 128, 256, 8
        $region81: #{tictactoe_net.1} parent=72 // pred_fallthru
          _
      $region73: #{tictactoe_net.1} parent=5 // pred_fallthru
        _
      %p466 = scmp.le.s32.totalorder 2, %s13
      // Predicated region
      $region82: #{tictactoe_net.1} parent=5 // pred_check
        %p467 = pneg %p466
      $region83: #{tictactoe_net.1} parent=5 // pred_check_branch
        %469 = sbr.rel (%p467) target = $region85
      $region84: #{tictactoe_net.1} parent=5 // pred_region
        %s470 = ssub.s32 %s13, 2
        // Predicated region
        $region86: #{tictactoe_net.1} parent=84 // pred_check
          %p471 = pneg %p131
        $region87: #{tictactoe_net.1} parent=84 // pred_check_branch
          %473 = sbr.rel (%p471) target = $region89
        $region88: #{tictactoe_net.1} parent=84 // pred_region
          %s474 = sand.u32 %s116, 1
          %s475 = scalar_lea.sflag [#allocation4], %s474
          %s476 = sand.u32 %s116, 1
          %s477 = smul.addr %s476, 16
          %s478 = scalar_lea.vmem [#allocation3], %s477
          %480 = dma.done %s475, 256
        $region89: #{tictactoe_net.1} parent=84 // pred_fallthru
          _
      $region85: #{tictactoe_net.1} parent=5 // pred_fallthru
        _
    $region6: #{tictactoe_net.1} parent=1 // loop_footer
      %s17 = sadd.s32 1, %s13
    $region7: #{tictactoe_net.1} parent=1 // loop_footer_branch
      %12 = sbr.rel target = $region3
    $region8: #{tictactoe_net.1} parent=1 // loop_exit
      _
    %481 = vsyncpa [#allocation4], 1
    %s482 = scalar_lea.sflag [#allocation4], 1
    %483 = vsyncpa %s482, 1

</llo_original>
